<compile_context>
chip_gen: v7x
topology: tpu7x:2x2x1
jax: 0.10.0
libtpu: 0.0.40
codegen_flags: <defaults>
</compile_context>

<pallas_src>
import jax
import jax.numpy as jnp
from jax.experimental import pallas as pl
from jax.experimental.pallas import tpu as pltpu


def ciat_kernel(h_ref, w1_ref, b1_ref, w2_ref, b2_ref, causal_ref, do_ref):
    # h_ref:  (tm, Dp)   bf16 row tile of hidden states (resident across j)
    # w1_ref: (Dp, tn)   causal_layer weight column block, in x out, bf16
    # b1_ref: (1, tn)    causal_layer bias block, f32
    # w2_ref: (Dp, Np)   folded do_calculus weight W1 @ W2 (zero-padded), bf16
    # b2_ref: (1, Np)    folded do_calculus bias  b1 @ W2 + b2, f32
    h = h_ref[...]

    # causal_states[:, j-block] = hidden @ W1[:, j-block] + b1[j-block]
    causal = jnp.dot(h, w1_ref[...], preferred_element_type=jnp.float32)
    causal_ref[...] = (causal + b1_ref[...]).astype(causal_ref.dtype)

    # do_calculus = hidden @ (W1 @ W2) + (b1 @ W2 + b2); independent of the
    # j sweep over W1 columns, so emit it once per row tile.
    @pl.when(pl.program_id(1) == 0)
    def _():
        do = jnp.dot(h, w2_ref[...], preferred_element_type=jnp.float32)
        do_ref[...] = (do + b2_ref[...]).astype(do_ref.dtype)


def _round_up(x, m):
    return pl.cdiv(x, m) * m


def _vmem_limit_bytes():
    """Generation-aware scoped-VMEM limit: 3/4 of per-core VMEM capacity."""
    try:
        cap = getattr(pltpu.get_tpu_info(), "vmem_capacity_bytes", None)
    except Exception:
        cap = None
    if not cap:
        cap = 64 * 1024 * 1024           # conservative fallback (v7x per-TC)
    return int(cap * 3 // 4)             # headroom for Mosaic scratch / spills


def _pick_tn(Dp, budget_bytes, itemsize=2, target=512):
    """Output-column tile for W1.  tn == Dp keeps W1 VMEM-resident (read once);
    otherwise W1 is streamed in (Dp, tn) blocks (large-D / v7x path)."""
    if Dp * Dp * itemsize <= budget_bytes:
        return Dp
    for tn in range(target, 255, -256):          # prefer 256-wide (v6e/v7x MXU)
        if Dp % tn == 0:
            return tn
    for tn in range(target, 127, -128):
        if Dp % tn == 0:
            return tn
    return 128                                    # 128 always divides Dp


def ciat_forward(hidden_states, w1, b1, w2, b2, *, tm=256,
                 compute_dtype=jnp.bfloat16, out_dtype=None):
    """hidden_states: (B, S, D); w1: (D, D) in x out; b1: (D,);
    w2: (D, 3) in x out; b2: (3,).  Returns (causal_states, do_calculus).

    Pass out_dtype=jnp.bfloat16 to halve the (M, D) causal writeback HBM
    traffic when downstream tolerates it (default keeps the input dtype)."""
    B, S, D = hidden_states.shape
    N = w2.shape[1]                                # = 3
    out_dtype = hidden_states.dtype if out_dtype is None else out_dtype
    M = B * S

    LANE = 128
    SUB = 16                                       # bf16 sublane packing
    Dp = _round_up(D, LANE)                        # lane-dense embedding width
    Np = LANE                                      # lane-dense do_calculus width

    vmem_limit = _vmem_limit_bytes()
    itemsize = jnp.dtype(compute_dtype).itemsize

    # Row tile: multiple of 16, no larger than the (padded) row count, and small
    # enough that the 'parallel' row axis has >= 2 steps (v7x megacore) when M
    # allows it.
    tm = max(SUB, min(int(tm), _round_up(M, SUB)))
    tm = _round_up(tm, SUB)
    if pl.cdiv(M, tm) < 2 and M > SUB:
        tm = max(SUB, _round_up(pl.cdiv(M, 2), SUB))
    Mp = _round_up(M, tm)                          # pad rows so the grid covers M

    # W1 output-column tile (budget ~1/3 of the VMEM limit for a resident W1).
    tn = _pick_tn(Dp, budget_bytes=vmem_limit // 3, itemsize=itemsize)

    # --- operand prep (only touch HBM when shapes are not already aligned) ---
    h = hidden_states.reshape(M, D).astype(compute_dtype)
    if Mp != M or Dp != D:
        h = jnp.pad(h, ((0, Mp - M), (0, Dp - D)))

    w1_f32 = w1.astype(jnp.float32)
    w2_f32 = w2.astype(jnp.float32)
    w2_fused = w1_f32 @ w2_f32                                   # (D, 3)
    b2_fused = b1.astype(jnp.float32) @ w2_f32 + b2.astype(jnp.float32)

    w1p = w1_f32.astype(compute_dtype)
    if Dp != D:
        w1p = jnp.pad(w1p, ((0, Dp - D), (0, Dp - D)))
    b1p = jnp.pad(b1.astype(jnp.float32), (0, Dp - D)).reshape(1, Dp)
    w2p = jnp.pad(w2_fused.astype(compute_dtype), ((0, Dp - D), (0, Np - N)))
    b2p = jnp.pad(b2_fused, (0, Np - N)).reshape(1, Np)

    grid = (Mp // tm, Dp // tn)

    # Single-buffer grid-invariant operands (constant index_map => no reason to
    # hold two copies in VMEM).  W1/b1 are constant only when fully resident.
    resident = {"pipeline_mode": pl.Buffered(1)}
    w1_kwargs = resident if tn == Dp else {}

    in_specs = [
        pl.BlockSpec((tm, Dp), lambda i, j: (i, 0)),               # hidden rows
        pl.BlockSpec((Dp, tn), lambda i, j: (0, j), **w1_kwargs),  # W1 columns
        pl.BlockSpec((1, tn), lambda i, j: (0, j), **w1_kwargs),   # b1
        pl.BlockSpec((Dp, Np), lambda i, j: (0, 0), **resident),   # W2' (const)
        pl.BlockSpec((1, Np), lambda i, j: (0, 0), **resident),    # b2' (const)
    ]
    out_specs = [
        pl.BlockSpec((tm, tn), lambda i, j: (i, j)),               # causal_states
        pl.BlockSpec((tm, Np), lambda i, j: (i, 0)),               # do (padded)
    ]

    out_itemsize = jnp.dtype(out_dtype).itemsize
    w1_reads = 1 if tn == Dp else Mp // tm
    bytes_accessed = (
        Mp * Dp * itemsize                        # hidden (read once)
        + w1_reads * Dp * Dp * itemsize           # W1 (re-streamed if tiled)
        + Dp * Np * itemsize + (Dp + Np) * 4      # W2' + biases
        + Mp * Dp * out_itemsize + Mp * Np * out_itemsize)
    cost = pl.CostEstimate(
        flops=2 * Mp * Dp * Dp + 2 * Mp * Dp * Np,
        transcendentals=0,
        bytes_accessed=int(bytes_accessed))

    causal_p, do_p = pl.pallas_call(
        ciat_kernel,
        out_shape=(
            jax.ShapeDtypeStruct((Mp, Dp), out_dtype),
            jax.ShapeDtypeStruct((Mp, Np), out_dtype),
        ),
        grid_spec=pltpu.PrefetchScalarGridSpec(
            num_scalar_prefetch=0,
            grid=grid,
            in_specs=in_specs,
            out_specs=out_specs,
        ),
        compiler_params=pltpu.CompilerParams(
            dimension_semantics=("parallel", "arbitrary"),
            vmem_limit_bytes=vmem_limit),
        cost_estimate=cost,
    )(h, w1p, b1p, w2p, b2p)

    causal = causal_p if (Mp == M and Dp == D) else causal_p[:M, :D]
    causal = causal.reshape(B, S, D)
    do = do_p[:M, :N].reshape(B, S, N)
    return causal, do


if __name__ == "__main__":
    # Small shapes consistent with the module: batch=2, seq=8, n_embd=32.
    B, S, D = 2, 8, 32
    key = jax.random.PRNGKey(0)
    k_h, k_w1, k_b1, k_w2, k_b2 = jax.random.split(key, 5)

    # Synthetic "last_hidden_state" from the (stubbed) base model.
    hidden_states = jax.random.normal(k_h, (B, S, D), dtype=jnp.float32)

    # PyTorch nn.Linear stores weight as (out_features, in_features); create it
    # that way then transpose to (in, out) for the x @ W convention.
    w1_torch = jax.random.normal(k_w1, (D, D), dtype=jnp.float32) * 0.02
    b1 = jax.random.normal(k_b1, (D,), dtype=jnp.float32) * 0.02
    w2_torch = jax.random.normal(k_w2, (3, D), dtype=jnp.float32) * 0.02
    b2 = jax.random.normal(k_b2, (3,), dtype=jnp.float32) * 0.02
    w1 = w1_torch.T  # (D, D) in x out
    w2 = w2_torch.T  # (D, 3) in x out

    causal_states, do_calculus = ciat_forward(hidden_states, w1, b1, w2, b2)
    jax.block_until_ready((causal_states, do_calculus))

    # f32 reference (same math as the PyTorch module).  The kernel feeds the
    # MXU bf16 inputs with f32 accumulation and folds W2 through W1 (do =
    # h @ (W1 @ W2) + (b1 @ W2 + b2)), so tolerances are loosened accordingly.
    causal_ref = hidden_states @ w1 + b1
    do_ref = causal_ref @ w2 + b2
    assert causal_states.shape == (B, S, D)
    assert do_calculus.shape == (B, S, 3)
    assert jnp.allclose(causal_states, causal_ref, atol=2e-2, rtol=2e-2)
    assert jnp.allclose(do_calculus, do_ref, atol=2e-2, rtol=2e-2)

    print("KERNEL_OK")
</pallas_src>

<mosaic_0001>
module attributes {stable_mosaic.version = 11 : i64} {
  func.func @ciat_kernel(%arg0: i32, %arg1: i32, %arg2: memref<16x128xbf16, #tpu.memory_space<vmem>>, %arg3: memref<128x128xbf16, #tpu.memory_space<vmem>>, %arg4: memref<1x128xf32, #tpu.memory_space<vmem>>, %arg5: memref<128x128xbf16, #tpu.memory_space<vmem>>, %arg6: memref<1x128xf32, #tpu.memory_space<vmem>>, %arg7: memref<16x128xf32, #tpu.memory_space<vmem>>, %arg8: memref<16x128xf32, #tpu.memory_space<vmem>>) attributes {dimension_semantics = [#tpu.dimension_semantics<parallel>, #tpu.dimension_semantics<arbitrary>], iteration_bounds = array<i64: 1, 1>, scalar_prefetch = 0 : i64, scratch_operands = 0 : i64, tpu.core_type = #tpu.core_type<tc>, window_params = [{transform_indices = @transform_0, window_bounds = array<i64: 16, 128>}, {pipeline_mode = #tpu.pipeline_mode<synchronous>, transform_indices = @transform_1, window_bounds = array<i64: 128, 128>}, {pipeline_mode = #tpu.pipeline_mode<synchronous>, transform_indices = @transform_2, window_bounds = array<i64: 1, 128>}, {pipeline_mode = #tpu.pipeline_mode<synchronous>, transform_indices = @transform_3, window_bounds = array<i64: 128, 128>}, {pipeline_mode = #tpu.pipeline_mode<synchronous>, transform_indices = @transform_4, window_bounds = array<i64: 1, 128>}, {transform_indices = @transform_5, window_bounds = array<i64: 16, 128>}, {transform_indices = @transform_6, window_bounds = array<i64: 16, 128>}]} {
    %c0 = arith.constant 0 : index
    %c0_0 = arith.constant 0 : index
    %0 = vector.load %arg2[%c0, %c0_0] : memref<16x128xbf16, #tpu.memory_space<vmem>>, vector<16x128xbf16>
    %c0_1 = arith.constant 0 : index
    %c0_2 = arith.constant 0 : index
    %1 = vector.load %arg3[%c0_1, %c0_2] : memref<128x128xbf16, #tpu.memory_space<vmem>>, vector<128x128xbf16>
    %cst = arith.constant dense<0.000000e+00> : vector<16x128xf32>
    %2 = tpu.matmul %0, %1, %cst {dimension_numbers = #tpu.dot_dimension_numbers<[1], [0], [0], [1], [0, 0, 1, 1], [], []>} : vector<16x128xbf16>, vector<128x128xbf16>, vector<16x128xf32> -> vector<16x128xf32>
    %c0_3 = arith.constant 0 : index
    %c0_4 = arith.constant 0 : index
    %3 = vector.load %arg4[%c0_3, %c0_4] : memref<1x128xf32, #tpu.memory_space<vmem>>, vector<1x128xf32>
    %4 = vector.broadcast %3 : vector<1x128xf32> to vector<16x128xf32>
    %5 = arith.addf %2, %4 : vector<16x128xf32>
    %c0_5 = arith.constant 0 : index
    %c0_6 = arith.constant 0 : index
    %6 = vector.load %arg7[%c0_5, %c0_6] : memref<16x128xf32, #tpu.memory_space<vmem>>, vector<16x128xf32>
    tpu.vector_store %arg7[%c0_5, %c0_6], %5 {strides = array<i32>} : memref<16x128xf32, #tpu.memory_space<vmem>>, vector<16x128xf32>,
    %c0_i32 = arith.constant 0 : i32
    %7 = arith.cmpi eq, %arg1, %c0_i32 : i32
    %8 = arith.extui %7 : i1 to i32
    %c0_i32_7 = arith.constant 0 : i32
    %9 = arith.cmpi ne, %8, %c0_i32_7 : i32
    scf.if %9 {
      %c0_8 = arith.constant 0 : index
      %c0_9 = arith.constant 0 : index
      %10 = vector.load %arg5[%c0_8, %c0_9] : memref<128x128xbf16, #tpu.memory_space<vmem>>, vector<128x128xbf16>
      %cst_10 = arith.constant dense<0.000000e+00> : vector<16x128xf32>
      %11 = tpu.matmul %0, %10, %cst_10 {dimension_numbers = #tpu.dot_dimension_numbers<[1], [0], [0], [1], [0, 0, 1, 1], [], []>} : vector<16x128xbf16>, vector<128x128xbf16>, vector<16x128xf32> -> vector<16x128xf32>
      %c0_11 = arith.constant 0 : index
      %c0_12 = arith.constant 0 : index
      %12 = vector.load %arg6[%c0_11, %c0_12] : memref<1x128xf32, #tpu.memory_space<vmem>>, vector<1x128xf32>
      %13 = vector.broadcast %12 : vector<1x128xf32> to vector<16x128xf32>
      %14 = arith.addf %11, %13 : vector<16x128xf32>
      %c0_13 = arith.constant 0 : index
      %c0_14 = arith.constant 0 : index
      %15 = vector.load %arg8[%c0_13, %c0_14] : memref<16x128xf32, #tpu.memory_space<vmem>>, vector<16x128xf32>
      tpu.vector_store %arg8[%c0_13, %c0_14], %14 {strides = array<i32>} : memref<16x128xf32, #tpu.memory_space<vmem>>, vector<16x128xf32>,
    } else {
    }
    return
  }
  func.func @transform_0(%arg0: i32, %arg1: i32) -> (i32, i32) {
    %c0_i32 = arith.constant 0 : i32
    %c0_i32_0 = arith.constant 0 : i32
    return %arg0, %c0_i32 : i32, i32
  }
  func.func @transform_1(%arg0: i32, %arg1: i32) -> (i32, i32) {
    %c0_i32 = arith.constant 0 : i32
    %c0_i32_0 = arith.constant 0 : i32
    return %c0_i32, %arg1 : i32, i32
  }
  func.func @transform_2(%arg0: i32, %arg1: i32) -> (i32, i32) {
    %c0_i32 = arith.constant 0 : i32
    %c0_i32_0 = arith.constant 0 : i32
    return %c0_i32, %arg1 : i32, i32
  }
  func.func @transform_3(%arg0: i32, %arg1: i32) -> (i32, i32) {
    %c0_i32 = arith.constant 0 : i32
    %c0_i32_0 = arith.constant 0 : i32
    %c0_i32_1 = arith.constant 0 : i32
    return %c0_i32, %c0_i32_0 : i32, i32
  }
  func.func @transform_4(%arg0: i32, %arg1: i32) -> (i32, i32) {
    %c0_i32 = arith.constant 0 : i32
    %c0_i32_0 = arith.constant 0 : i32
    %c0_i32_1 = arith.constant 0 : i32
    return %c0_i32, %c0_i32_0 : i32, i32
  }
  func.func @transform_5(%arg0: i32, %arg1: i32) -> (i32, i32) {
    %c0_i32 = arith.constant 0 : i32
    return %arg0, %arg1 : i32, i32
  }
  func.func @transform_6(%arg0: i32, %arg1: i32) -> (i32, i32) {
    %c0_i32 = arith.constant 0 : i32
    %c0_i32_0 = arith.constant 0 : i32
    return %arg0, %c0_i32 : i32, i32
  }
}

</mosaic_0001>

<llo_original>
// kernel: tpu_custom_call.1
$region0: #{tpu_custom_call.1}
  #allocation0 [shape = 'u32[]', space=smem, size = 0x4, offset = 0x4, fixed_abs, tag = 'smem constant byte address 0x4 - core index']
  #allocation1 [shape = 'u32[144,128]{1,0:T(1,128)}', space=vmem, size = 0x12000, scoped, tag = 'internal scratch']
  %s0 = inlined_call_operand.hbm [shape: bf16[16,128], index: 0, kind: input, shape index: {}]
  %s1 = inlined_call_operand.hbm [shape: bf16[128,128], index: 1, kind: input, shape index: {}]
  %s2 = inlined_call_operand.vmem [shape: f32[1,128], index: 2, kind: input, shape index: {}]
  %s3 = inlined_call_operand.hbm [shape: bf16[128,128], index: 3, kind: input, shape index: {}]
  %s4 = inlined_call_operand.vmem [shape: f32[1,128], index: 4, kind: input, shape index: {}]
  %s5 = inlined_call_operand.hbm [shape: f32[16,128], index: 5, kind: output, shape index: {0}]
  %s6 = inlined_call_operand.hbm [shape: f32[16,128], index: 6, kind: output, shape index: {1}]
  %7 = xla_tuple %s5, %s6
  %s8 = sld [smem:[#allocation0]]
  $region54: #{tpu_custom_call.1} parent=0
    _
  %s10 = ssub.s32 1, %s8
  %s11 = scalar_select 0, %s10, %s8
  $region1: #{tpu_custom_call.1} parent=0
    #allocation2 [shape = 'u8[4096]{0}', space=vmem, size = 0x1000, scoped, tag = 'input window, operand 0, single buffered']
    #allocation3 [shape = 's32[1]{0}', space=sflag, size = 0x4, scoped, tag = 'scoped memory for tpu_custom_call.1']
    #allocation4 [shape = 's32[1]{0}', space=sflag, size = 0x4, scoped, tag = 'scoped memory for tpu_custom_call.1']
    #allocation5 [shape = 'u8[32768]{0}', space=vmem, size = 0x8000, scoped, tag = 'input window, operand 1, single buffered']
    #allocation6 [shape = 's32[1]{0}', space=sflag, size = 0x4, scoped, tag = 'scoped memory for tpu_custom_call.1']
    #allocation7 [shape = 'u8[32768]{0}', space=vmem, size = 0x8000, scoped, tag = 'input window, operand 3, single buffered']
    #allocation8 [shape = 'u8[8192]{0}', space=vmem, size = 0x2000, scoped, tag = 'output window, operand 0, single buffered']
    #allocation9 [shape = 'u8[8192]{0}', space=vmem, size = 0x2000, scoped, tag = 'output window, operand 1, single buffered']
    #allocation10 [shape = 's32[1]{0}', space=sflag, size = 0x4, scoped, tag = 'scoped memory for tpu_custom_call.1']
    %12 = vsyncpa [#allocation3], 0
    %13 = vsyncpa [#allocation6], 0
    %14 = vsyncpa [#allocation4], 0
    %15 = vsyncpa [#allocation10], 0
    // Predicated region
    $region2: #{tpu_custom_call.1} parent=1 // pred_check
      _
    $region3: #{tpu_custom_call.1} parent=1 // pred_check_branch
      %17 = sbr.rel (0) target = $region5
    $region4: #{tpu_custom_call.1} parent=1 // pred_region
      %s19 = ssub.s32 128, 128
      %20 = vsyncadd [#allocation3], %s19
      %s21 = sshll.u32 [#allocation2], 4
      %s22 = int_to_ptr.vmem [resolvable:$true] %s21
      %27 = dma.hbm_to_vmem [thread:$0]  %s0, 128, %s22, [#allocation3], 64, 64, 4
    $region5: #{tpu_custom_call.1} parent=1 // pred_fallthru
      _
    // Predicated region
    $region6: #{tpu_custom_call.1} parent=1 // pred_check
      _
    $region7: #{tpu_custom_call.1} parent=1 // pred_check_branch
      %29 = sbr.rel (0) target = $region9
    $region8: #{tpu_custom_call.1} parent=1 // pred_region
      %s31 = ssub.s32 1024, 1024
      %32 = vsyncadd [#allocation6], %s31
      %s33 = sshll.u32 [#allocation5], 4
      %s34 = int_to_ptr.vmem [resolvable:$true] %s33
      %39 = dma.hbm_to_vmem [thread:$0]  %s1, 1024, %s34, [#allocation6], 64, 64, 4
    $region9: #{tpu_custom_call.1} parent=1 // pred_fallthru
      _
    // Predicated region
    $region10: #{tpu_custom_call.1} parent=1 // pred_check
      _
    $region11: #{tpu_custom_call.1} parent=1 // pred_check_branch
      %41 = sbr.rel (0) target = $region13
    $region12: #{tpu_custom_call.1} parent=1 // pred_region
      _
    $region13: #{tpu_custom_call.1} parent=1 // pred_fallthru
      _
    // Predicated region
    $region14: #{tpu_custom_call.1} parent=1 // pred_check
      _
    $region15: #{tpu_custom_call.1} parent=1 // pred_check_branch
      %43 = sbr.rel (0) target = $region17
    $region16: #{tpu_custom_call.1} parent=1 // pred_region
      %s45 = ssub.s32 1024, 1024
      %46 = vsyncadd [#allocation6], %s45
      %s47 = sshll.u32 [#allocation7], 4
      %s48 = int_to_ptr.vmem [resolvable:$true] %s47
      %53 = dma.hbm_to_vmem [thread:$0]  %s3, 1024, %s48, [#allocation6], 64, 64, 4
    $region17: #{tpu_custom_call.1} parent=1 // pred_fallthru
      _
    // Predicated region
    $region18: #{tpu_custom_call.1} parent=1 // pred_check
      _
    $region19: #{tpu_custom_call.1} parent=1 // pred_check_branch
      %55 = sbr.rel (0) target = $region21
    $region20: #{tpu_custom_call.1} parent=1 // pred_region
      _
    $region21: #{tpu_custom_call.1} parent=1 // pred_fallthru
      _
    // Predicated region
    $region22: #{tpu_custom_call.1} parent=1 // pred_check
      _
    $region23: #{tpu_custom_call.1} parent=1 // pred_check_branch
      %57 = sbr.rel (0) target = $region25
    $region24: #{tpu_custom_call.1} parent=1 // pred_region
      %58 = dma.done [#allocation3], 128
    $region25: #{tpu_custom_call.1} parent=1 // pred_fallthru
      _
    // Predicated region
    $region26: #{tpu_custom_call.1} parent=1 // pred_check
      _
    $region27: #{tpu_custom_call.1} parent=1 // pred_check_branch
      %60 = sbr.rel (0) target = $region29
    $region28: #{tpu_custom_call.1} parent=1 // pred_region
      %61 = dma.done [#allocation6], 1024
    $region29: #{tpu_custom_call.1} parent=1 // pred_fallthru
      _
    // Predicated region
    $region30: #{tpu_custom_call.1} parent=1 // pred_check
      _
    $region31: #{tpu_custom_call.1} parent=1 // pred_check_branch
      %63 = sbr.rel (0) target = $region33
    $region32: #{tpu_custom_call.1} parent=1 // pred_region
      %64 = dma.done [#allocation6], 1024
    $region33: #{tpu_custom_call.1} parent=1 // pred_fallthru
      _
    %v66 = vld [vmem:[#allocation2] sm:$0xf]
    %v67 = vld [vmem:[#allocation2 + $0x4] sm:$0xf]
    %v68 = vld [vmem:[#allocation5] sm:$0xf]
    %v69 = vld [vmem:[#allocation5 + $0x4] sm:$0xf]
    %v70 = vld [vmem:[#allocation5 + $0x8] sm:$0xf]
    %v71 = vld [vmem:[#allocation5 + $0xc] sm:$0xf]
    %v72 = vld [vmem:[#allocation5 + $0x10] sm:$0xf]
    %v73 = vld [vmem:[#allocation5 + $0x14] sm:$0xf]
    %v74 = vld [vmem:[#allocation5 + $0x18] sm:$0xf]
    %v75 = vld [vmem:[#allocation5 + $0x1c] sm:$0xf]
    %v76 = vld [vmem:[#allocation5 + $0x20] sm:$0xf]
    %v77 = vld [vmem:[#allocation5 + $0x24] sm:$0xf]
    %v78 = vld [vmem:[#allocation5 + $0x28] sm:$0xf]
    %v79 = vld [vmem:[#allocation5 + $0x2c] sm:$0xf]
    %v80 = vld [vmem:[#allocation5 + $0x30] sm:$0xf]
    %v81 = vld [vmem:[#allocation5 + $0x34] sm:$0xf]
    %v82 = vld [vmem:[#allocation5 + $0x38] sm:$0xf]
    %v83 = vld [vmem:[#allocation5 + $0x3c] sm:$0xf]
    %v84 = vld [vmem:[%s2] sm:$0x1]
    %v86 = vlaneseq
    %v87 = vshrl.u32 %v86, 7
    %v88 = vsub.s32 0, %v87
    %v89 = vrot.slane %v84, %v88
    %v93 = vunpack.c.l.b16 %v66
    %v94 = vunpack.c.l.b16 %v67
    %v95 = vpack.c.b16 %v94, %v93
    %v113 = vunpack.c.l.b16 %v68
    %v114 = vunpack.c.l.b16 %v69
    %v115 = vunpack.c.l.b16 %v70
    %v116 = vunpack.c.l.b16 %v71
    %v117 = vunpack.c.l.b16 %v72
    %v118 = vunpack.c.l.b16 %v73
    %v119 = vunpack.c.l.b16 %v74
    %v120 = vunpack.c.l.b16 %v75
    %v121 = vunpack.c.l.b16 %v76
    %v122 = vunpack.c.l.b16 %v77
    %v123 = vunpack.c.l.b16 %v78
    %v124 = vunpack.c.l.b16 %v79
    %v125 = vunpack.c.l.b16 %v80
    %v126 = vunpack.c.l.b16 %v81
    %v127 = vunpack.c.l.b16 %v82
    %v128 = vunpack.c.l.b16 %v83
    %v129 = vpack.c.b16 %v114, %v113
    %v130 = vpack.c.b16 %v116, %v115
    %v131 = vpack.c.b16 %v118, %v117
    %v132 = vpack.c.b16 %v120, %v119
    %v133 = vpack.c.b16 %v122, %v121
    %v134 = vpack.c.b16 %v124, %v123
    %v135 = vpack.c.b16 %v126, %v125
    %v136 = vpack.c.b16 %v128, %v127
    %145 = vmatprep.subr.bf16.mxu0 0
    %146 = vmatpush1.bf16.msra.mxu0 %v129
    %147 = vmatprep.subr.bf16.mxu0 0
    %148 = vmatpush1.bf16.msra.mxu0 %v130
    %149 = vmatprep.subr.bf16.mxu0 0
    %150 = vmatpush1.bf16.msra.mxu0 %v131
    %151 = vmatprep.subr.bf16.mxu0 0
    %152 = vmatpush1.bf16.msra.mxu0 %v132
    %153 = vmatprep.subr.bf16.mxu0 0
    %154 = vmatpush1.bf16.msra.mxu0 %v133
    %155 = vmatprep.subr.bf16.mxu0 0
    %156 = vmatpush1.bf16.msra.mxu0 %v134
    %157 = vmatprep.subr.bf16.mxu0 0
    %158 = vmatpush1.bf16.msra.mxu0 %v135
    %159 = vmatprep.subr.bf16.mxu0 0
    %160 = vmatpush1.bf16.msra.mxu0 %v136
    %161 = vmatprep.subr.bf16.mxu0 0
    %162 = vmatpush1.bf16.msra.mxu0 0
    %163 = vmatprep.subr.bf16.mxu0 0
    %164 = vmatpush1.bf16.msra.mxu0 0
    %165 = vmatprep.subr.bf16.mxu0 0
    %166 = vmatpush1.bf16.msra.mxu0 0
    %167 = vmatprep.subr.bf16.mxu0 0
    %168 = vmatpush1.bf16.msra.mxu0 0
    %169 = vmatprep.subr.bf16.mxu0 0
    %170 = vmatpush1.bf16.msra.mxu0 0
    %171 = vmatprep.subr.bf16.mxu0 0
    %172 = vmatpush1.bf16.msra.mxu0 0
    %173 = vmatprep.subr.bf16.mxu0 0
    %174 = vmatpush1.bf16.msra.mxu0 0
    %175 = vmatprep.subr.bf16.mxu0 0
    %176 = vmatpush1.bf16.msra.mxu0 0
    %177 = vmatprep.mubr.bf16.mxu0 0
    %178 = vmatmul.mubr.bf16.gmra.mrb[0].mxu0 %v95
    %v179 = vpop.f32.mrb[0].mxu0
    %v180 = vadd.f32 %v89, %v179
    %v181 = vpop.f32.mrb[0].mxu0
    %v182 = vpop.f32.mrb[0].mxu0
    %v183 = vadd.f32 %v89, %v182
    %v184 = vpop.f32.mrb[0].mxu0
    %185 = vdwg.mxu0
    %186 = vst [vmem:[#allocation8] sm:$0xff] %v180
    %187 = vst [vmem:[#allocation8 + $0x8] sm:$0xff] %v183
    %p188 = scmp.eq.s32.totalorder 0, 0
    // Predicated region
    $region34: #{tpu_custom_call.1} parent=1 // pred_check
      %p189 = pneg %p188
    $region35: #{tpu_custom_call.1} parent=1 // pred_check_branch
      %191 = sbr.rel (%p189) target = $region37
    $region36: #{tpu_custom_call.1} parent=1 // pred_region
      %v192 = vld [vmem:[#allocation7] sm:$0xf]
      %v193 = vld [vmem:[#allocation7 + $0x4] sm:$0xf]
      %v194 = vld [vmem:[#allocation7 + $0x8] sm:$0xf]
      %v195 = vld [vmem:[#allocation7 + $0xc] sm:$0xf]
      %v196 = vld [vmem:[#allocation7 + $0x10] sm:$0xf]
      %v197 = vld [vmem:[#allocation7 + $0x14] sm:$0xf]
      %v198 = vld [vmem:[#allocation7 + $0x18] sm:$0xf]
      %v199 = vld [vmem:[#allocation7 + $0x1c] sm:$0xf]
      %v200 = vld [vmem:[#allocation7 + $0x20] sm:$0xf]
      %v201 = vld [vmem:[#allocation7 + $0x24] sm:$0xf]
      %v202 = vld [vmem:[#allocation7 + $0x28] sm:$0xf]
      %v203 = vld [vmem:[#allocation7 + $0x2c] sm:$0xf]
      %v204 = vld [vmem:[#allocation7 + $0x30] sm:$0xf]
      %v205 = vld [vmem:[#allocation7 + $0x34] sm:$0xf]
      %v206 = vld [vmem:[#allocation7 + $0x38] sm:$0xf]
      %v207 = vld [vmem:[#allocation7 + $0x3c] sm:$0xf]
      %v208 = vld [vmem:[%s4] sm:$0x1]
      %v210 = vlaneseq
      %v211 = vshrl.u32 %v210, 7
      %v212 = vsub.s32 0, %v211
      %v213 = vrot.slane %v208, %v212
      %v231 = vunpack.c.l.b16 %v192
      %v232 = vunpack.c.l.b16 %v193
      %v233 = vunpack.c.l.b16 %v194
      %v234 = vunpack.c.l.b16 %v195
      %v235 = vunpack.c.l.b16 %v196
      %v236 = vunpack.c.l.b16 %v197
      %v237 = vunpack.c.l.b16 %v198
      %v238 = vunpack.c.l.b16 %v199
      %v239 = vunpack.c.l.b16 %v200
      %v240 = vunpack.c.l.b16 %v201
      %v241 = vunpack.c.l.b16 %v202
      %v242 = vunpack.c.l.b16 %v203
      %v243 = vunpack.c.l.b16 %v204
      %v244 = vunpack.c.l.b16 %v205
      %v245 = vunpack.c.l.b16 %v206
      %v246 = vunpack.c.l.b16 %v207
      %v247 = vpack.c.b16 %v232, %v231
      %v248 = vpack.c.b16 %v234, %v233
      %v249 = vpack.c.b16 %v236, %v235
      %v250 = vpack.c.b16 %v238, %v237
      %v251 = vpack.c.b16 %v240, %v239
      %v252 = vpack.c.b16 %v242, %v241
      %v253 = vpack.c.b16 %v244, %v243
      %v254 = vpack.c.b16 %v246, %v245
      %263 = vmatprep.subr.bf16.mxu0 0
      %264 = vmatpush1.bf16.msra.mxu0 %v247
      %265 = vmatprep.subr.bf16.mxu0 0
      %266 = vmatpush1.bf16.msra.mxu0 %v248
      %267 = vmatprep.subr.bf16.mxu0 0
      %268 = vmatpush1.bf16.msra.mxu0 %v249
      %269 = vmatprep.subr.bf16.mxu0 0
      %270 = vmatpush1.bf16.msra.mxu0 %v250
      %271 = vmatprep.subr.bf16.mxu0 0
      %272 = vmatpush1.bf16.msra.mxu0 %v251
      %273 = vmatprep.subr.bf16.mxu0 0
      %274 = vmatpush1.bf16.msra.mxu0 %v252
      %275 = vmatprep.subr.bf16.mxu0 0
      %276 = vmatpush1.bf16.msra.mxu0 %v253
      %277 = vmatprep.subr.bf16.mxu0 0
      %278 = vmatpush1.bf16.msra.mxu0 %v254
      %279 = vmatprep.subr.bf16.mxu0 0
      %280 = vmatpush1.bf16.msra.mxu0 0
      %281 = vmatprep.subr.bf16.mxu0 0
      %282 = vmatpush1.bf16.msra.mxu0 0
      %283 = vmatprep.subr.bf16.mxu0 0
      %284 = vmatpush1.bf16.msra.mxu0 0
      %285 = vmatprep.subr.bf16.mxu0 0
      %286 = vmatpush1.bf16.msra.mxu0 0
      %287 = vmatprep.subr.bf16.mxu0 0
      %288 = vmatpush1.bf16.msra.mxu0 0
      %289 = vmatprep.subr.bf16.mxu0 0
      %290 = vmatpush1.bf16.msra.mxu0 0
      %291 = vmatprep.subr.bf16.mxu0 0
      %292 = vmatpush1.bf16.msra.mxu0 0
      %293 = vmatprep.subr.bf16.mxu0 0
      %294 = vmatpush1.bf16.msra.mxu0 0
      %295 = vmatprep.mubr.bf16.mxu0 0
      %296 = vmatmul.mubr.bf16.gmra.mrb[0].mxu0 %v95
      %v297 = vpop.f32.mrb[0].mxu0
      %v298 = vadd.f32 %v213, %v297
      %v299 = vpop.f32.mrb[0].mxu0
      %v300 = vpop.f32.mrb[0].mxu0
      %v301 = vadd.f32 %v213, %v300
      %v302 = vpop.f32.mrb[0].mxu0
      %303 = vdwg.mxu0
      %304 = vst [vmem:[#allocation9] sm:$0xff] %v298
      %305 = vst [vmem:[#allocation9 + $0x8] sm:$0xff] %v301
    $region37: #{tpu_custom_call.1} parent=1 // pred_fallthru
      _
    // Predicated region
    $region38: #{tpu_custom_call.1} parent=1 // pred_check
      _
    $region39: #{tpu_custom_call.1} parent=1 // pred_check_branch
      %307 = sbr.rel (0) target = $region41
    $region40: #{tpu_custom_call.1} parent=1 // pred_region
      %s309 = ssub.s32 256, 256
      %310 = vsyncadd [#allocation4], %s309
      %s311 = sshll.u32 [#allocation8], 4
      %s312 = int_to_ptr.vmem [resolvable:$true] %s311
      %317 = dma.vmem_to_hbm [thread:$0]  %s312, 256, %s5, [#allocation4], 128, 128, 8
    $region41: #{tpu_custom_call.1} parent=1 // pred_fallthru
      _
    // Predicated region
    $region42: #{tpu_custom_call.1} parent=1 // pred_check
      _
    $region43: #{tpu_custom_call.1} parent=1 // pred_check_branch
      %319 = sbr.rel (0) target = $region45
    $region44: #{tpu_custom_call.1} parent=1 // pred_region
      %s321 = ssub.s32 256, 256
      %322 = vsyncadd [#allocation10], %s321
      %s323 = sshll.u32 [#allocation9], 4
      %s324 = int_to_ptr.vmem [resolvable:$true] %s323
      %329 = dma.vmem_to_hbm [thread:$0]  %s324, 256, %s6, [#allocation10], 128, 128, 8
    $region45: #{tpu_custom_call.1} parent=1 // pred_fallthru
      _
    // Predicated region
    $region46: #{tpu_custom_call.1} parent=1 // pred_check
      _
    $region47: #{tpu_custom_call.1} parent=1 // pred_check_branch
      %331 = sbr.rel (0) target = $region49
    $region48: #{tpu_custom_call.1} parent=1 // pred_region
      %332 = dma.done [#allocation4], 256
    $region49: #{tpu_custom_call.1} parent=1 // pred_fallthru
      _
    // Predicated region
    $region50: #{tpu_custom_call.1} parent=1 // pred_check
      _
    $region51: #{tpu_custom_call.1} parent=1 // pred_check_branch
      %334 = sbr.rel (0) target = $region53
    $region52: #{tpu_custom_call.1} parent=1 // pred_region
      %335 = dma.done [#allocation10], 256
    $region53: #{tpu_custom_call.1} parent=1 // pred_fallthru
      _
    %336 = vsyncpa [#allocation3], 1
    %337 = vsyncpa [#allocation6], 1
    %338 = vsyncpa [#allocation4], 1
    %339 = vsyncpa [#allocation10], 1

</llo_original>
